<compile_context>
chip_gen: v7x
topology: tpu7x:2x2x1
jax: 0.10.0
libtpu: 0.0.40
codegen_flags: <defaults>
</compile_context>

<pallas_src>
import jax
import jax.numpy as jnp
from jax.experimental import pallas as pl
from jax.experimental.pallas import tpu as pltpu


def _rep_by_rat_kernel(x_ref, mask_ref, w1_ref, b1_ref, w2_ref, out_ref):
    # x_ref    : [TB, seq, hdim]   bf16  (activation stream — sets the HBM roofline)
    # mask_ref : [TB, R, seq]      bf16  (0/1; seq on lanes -> dense tiles)
    # w1_ref   : [hdim, RL_PAD]    bf16  (all ratings' proj weights, packed, zero-padded)
    # b1_ref   : [1, RL_PAD]       f32
    # w2_ref   : [RL_PAD, R]       f32   (block-diagonal inner-product weights)
    # out_ref  : [TB, R, hdim]     f32 (or x dtype)
    x = x_ref[...]
    tb, seq, hdim = x.shape
    r = out_ref.shape[1]

    mask = mask_ref[...].astype(jnp.float32)           # [TB, R, seq]

    # ---- fused projection for all R ratings (one bf16 MXU matmul, f32 accumulate) ----
    x2 = x.reshape(tb * seq, hdim)                     # [TB*seq, hdim] bf16
    h = jnp.tanh(
        jnp.dot(x2, w1_ref[...], preferred_element_type=jnp.float32) + b1_ref[...]
    )                                                  # [TB*seq, RL_PAD] f32

    # ---- all R logit columns with one block-diagonal matmul (no N=1 matmul) ----
    logits = jnp.dot(h, w2_ref[...], preferred_element_type=jnp.float32)   # [TB*seq, R]
    # Put seq on the lane axis for the whole softmax path (R=5 on lanes wastes ~25x vregs).
    logits = jnp.transpose(logits.reshape(tb, seq, r), (0, 2, 1))           # [TB, R, seq]

    # ---- masked softmax over seq (last / lane axis) ----
    logits = jnp.where(mask > 0.5, logits, jnp.float32(-100000000.0))
    m = jnp.max(logits, axis=-1, keepdims=True)        # [TB, R, 1]
    e = jnp.exp(logits - m)                            # [TB, R, seq]
    denom = jnp.sum(e, axis=-1, keepdims=True)         # [TB, R, 1]
    scores = e * pl.reciprocal(denom, approx=True)     # [TB, R, seq]
    # Exactly zero masked positions (== input masked_fill then scores*x for finite inputs).
    scores = scores * mask

    # ---- weighted sum over seq on the MXU (bf16 inputs, f32 accumulate) ----
    out = jnp.einsum(
        "brs,bsh->brh", scores.astype(jnp.bfloat16), x,
        preferred_element_type=jnp.float32,
    )                                                  # [TB, R, hdim]
    out_ref[...] = out.astype(out_ref.dtype)


def _pick_batch_tile(bz, seq, hdim, R, rl_pad, vmem_budget_bytes):
    """VMEM-aware batch tile: fits the budget, yields >=2-4 grid steps for
    pipelining / TensorCore sharding, and prefers divisors of bz (no pad copy)."""
    r_pad = ((R + 7) // 8) * 8
    per_row = (
        2 * seq * hdim * 2            # x tile, bf16, double-buffered
        + 2 * r_pad * seq * 2         # mask tile, bf16, double-buffered
        + 2 * r_pad * hdim * 4        # out tile, f32, double-buffered
        + seq * rl_pad * 4            # h (f32)
        + seq * 128 * 4               # logits before transpose (R padded to a lane group)
        + 4 * r_pad * seq * 4         # mask f32, logits_t, e, scores (f32)
        + r_pad * seq * 2             # scores cast to bf16
        + r_pad * hdim * 4            # einsum accumulator
    )
    weights = 2 * (hdim * rl_pad * 2 + rl_pad * 128 * 4 + 8 * rl_pad * 4)
    budget = max(per_row, vmem_budget_bytes - weights)
    tb_max = max(1, min(256, budget // per_row))

    # At least 4 grid steps when the batch allows it (DMA overlap + v7x 2-TC sharding).
    if bz >= 4:
        min_tiles = 4
    elif bz >= 2:
        min_tiles = 2
    else:
        min_tiles = 1
    tb_target = int(max(1, min(tb_max, bz // min_tiles)))

    # Prefer a tile that divides bz exactly (avoids an HBM pad copy of x).
    tb = 1
    for cand in range(tb_target, 0, -1):
        if bz % cand == 0:
            tb = cand
            break
    if tb < max(1, tb_target // 2):   # bz nearly prime: accept padding over tiny tiles
        tb = tb_target
    return tb


def rep_by_rat_mask(x, masks, w1, b1, w2, *, tb=None,
                    vmem_budget_bytes=16 * 1024 * 1024):
    """x: [bz, seq, hdim] float; masks: [R, bz, seq] int (0/1);
    w1: [R, hdim, latent]; b1: [R, latent]; w2: [R, latent].
    Returns [bz, R, hdim] (same as the PyTorch module)."""
    bz, seq, hdim = x.shape
    R = masks.shape[0]
    latent = w1.shape[-1]
    rl = R * latent
    rl_pad = ((rl + 127) // 128) * 128
    out_dtype = x.dtype

    if tb is None:
        tb = _pick_batch_tile(bz, seq, hdim, R, rl_pad, vmem_budget_bytes)
    tb = int(max(1, min(tb, bz)))
    n_tiles = pl.cdiv(bz, tb)
    bz_pad = n_tiles * tb

    # ---- activation stream in bf16; mask as [bz, R, seq] bf16 (lane-dense) ----
    x_in = x.astype(jnp.bfloat16)
    mask_in = jnp.transpose(masks, (1, 0, 2)).astype(jnp.bfloat16)
    if bz_pad != bz:
        # Padded rows are fully masked -> exact zeros in the output (sliced off below).
        x_in = jnp.pad(x_in, ((0, bz_pad - bz), (0, 0), (0, 0)))
        mask_in = jnp.pad(mask_in, ((0, bz_pad - bz), (0, 0), (0, 0)))

    # ---- one-time weight packing (outside the kernel) ----
    # W1 packed so column r*latent + l == w1[r, :, l]; zero-padded to a 128-lane multiple.
    w1_all = jnp.transpose(w1, (1, 0, 2)).reshape(hdim, rl)
    w1_all = jnp.pad(w1_all, ((0, 0), (0, rl_pad - rl))).astype(jnp.bfloat16)
    b1_all = jnp.pad(b1.reshape(1, rl), ((0, 0), (0, rl_pad - rl))).astype(jnp.float32)
    # Block-diagonal inner-product weight: w2_blk[r*latent + l, r'] = w2[r, l] * (r == r').
    eye_r = jnp.eye(R, dtype=jnp.float32)
    w2_blk = (w2.astype(jnp.float32)[:, :, None] * eye_r[:, None, :]).reshape(rl, R)
    w2_blk = jnp.pad(w2_blk, ((0, rl_pad - rl), (0, 0)))

    out = pl.pallas_call(
        _rep_by_rat_kernel,
        out_shape=jax.ShapeDtypeStruct((bz_pad, R, hdim), out_dtype),
        grid_spec=pltpu.PrefetchScalarGridSpec(
            num_scalar_prefetch=0,
            grid=(n_tiles,),
            in_specs=[
                pl.BlockSpec((tb, seq, hdim), lambda b: (b, 0, 0)),
                pl.BlockSpec((tb, R, seq), lambda b: (b, 0, 0)),
                # Weights: full-array blocks with constant index maps -> resident in VMEM.
                pl.BlockSpec((hdim, rl_pad), lambda b: (0, 0)),
                pl.BlockSpec((1, rl_pad), lambda b: (0, 0)),
                pl.BlockSpec((rl_pad, R), lambda b: (0, 0)),
            ],
            out_specs=pl.BlockSpec((tb, R, hdim), lambda b: (b, 0, 0)),
        ),
        compiler_params=pltpu.CompilerParams(
            dimension_semantics=("parallel",),
            vmem_limit_bytes=32 * 1024 * 1024,
        ),
    )(x_in, mask_in, w1_all, b1_all, w2_blk)

    return out[:bz]


def rep_by_rat_mask_ref(x, masks, w1, b1, w2):
    """Pure-JAX f32 reference mirroring the PyTorch forward exactly (incl. input masked_fill)."""
    R = masks.shape[0]
    outs = []
    for r in range(R):
        m = masks[r] != 0                                        # [bz, seq]
        xm = jnp.where(m[:, :, None], x, 0.0)                    # masked inputs
        h = jnp.tanh(jnp.einsum("bsh,hl->bsl", xm, w1[r]) + b1[r])
        logits = jnp.einsum("bsl,l->bs", h, w2[r])               # [bz, seq]
        logits = jnp.where(m, logits, -100000000.0)
        scores = jax.nn.softmax(logits, axis=1)                  # [bz, seq]
        outs.append(jnp.sum(scores[:, :, None] * xm, axis=1))    # [bz, hdim]
    return jnp.stack(outs, axis=1)                               # [bz, R, hdim]


if __name__ == "__main__":
    bz, seq, hidden, latent = 2, 8, 32, 16
    R = 5  # num_type_of_rating

    key = jax.random.PRNGKey(0)
    k_x, k_m, k_w1, k_b1, k_w2 = jax.random.split(key, 5)

    x = jax.random.normal(k_x, (bz, seq, hidden), dtype=jnp.float32)
    masks = (jax.random.uniform(k_m, (R, bz, seq)) > 0.3).astype(jnp.int32)

    # Deterministic parameter init (nn.Linear-like scale), one set per rating type.
    w1 = jax.random.normal(k_w1, (R, hidden, latent), dtype=jnp.float32) * (hidden ** -0.5)
    b1 = jax.random.normal(k_b1, (R, latent), dtype=jnp.float32) * 0.01
    w2 = jax.random.normal(k_w2, (R, latent), dtype=jnp.float32) * (latent ** -0.5)

    out = rep_by_rat_mask(x, masks, w1, b1, w2)
    out = jax.block_until_ready(out)

    ref = rep_by_rat_mask_ref(x, masks, w1, b1, w2)
    assert out.shape == (bz, R, hidden)
    # Tolerance accounts for bf16 MXU inputs (x, W1, scores) and the EUP approximate
    # reciprocal in the softmax vs. the pure-f32 reference.
    assert jnp.allclose(out, ref, atol=3e-2, rtol=3e-2), "mismatch vs reference"

    print("KERNEL_OK")
</pallas_src>

<mosaic_0001>
module attributes {stable_mosaic.version = 11 : i64} {
  func.func @_rep_by_rat_kernel(%arg0: i32, %arg1: memref<1x8x32xbf16, #tpu.memory_space<vmem>>, %arg2: memref<1x5x8xbf16, #tpu.memory_space<vmem>>, %arg3: memref<32x128xbf16, #tpu.memory_space<vmem>>, %arg4: memref<1x128xf32, #tpu.memory_space<vmem>>, %arg5: memref<128x5xf32, #tpu.memory_space<vmem>>, %arg6: memref<1x5x32xf32, #tpu.memory_space<vmem>>) attributes {dimension_semantics = [#tpu.dimension_semantics<parallel>], iteration_bounds = array<i64: 2>, scalar_prefetch = 0 : i64, scratch_operands = 0 : i64, tpu.core_type = #tpu.core_type<tc>, window_params = [{transform_indices = @transform_0, window_bounds = array<i64: 1, 8, 32>}, {transform_indices = @transform_1, window_bounds = array<i64: 1, 5, 8>}, {pipeline_mode = #tpu.pipeline_mode<synchronous>, transform_indices = @transform_2, window_bounds = array<i64: 32, 128>}, {pipeline_mode = #tpu.pipeline_mode<synchronous>, transform_indices = @transform_3, window_bounds = array<i64: 1, 128>}, {pipeline_mode = #tpu.pipeline_mode<synchronous>, transform_indices = @transform_4, window_bounds = array<i64: 128, 5>}, {transform_indices = @transform_5, window_bounds = array<i64: 1, 5, 32>}]} {
    %c0 = arith.constant 0 : index
    %c0_0 = arith.constant 0 : index
    %c0_1 = arith.constant 0 : index
    %0 = vector.load %arg1[%c0, %c0_0, %c0_1] : memref<1x8x32xbf16, #tpu.memory_space<vmem>>, vector<1x8x32xbf16>
    %c0_2 = arith.constant 0 : index
    %c0_3 = arith.constant 0 : index
    %c0_4 = arith.constant 0 : index
    %1 = vector.load %arg2[%c0_2, %c0_3, %c0_4] : memref<1x5x8xbf16, #tpu.memory_space<vmem>>, vector<1x5x8xbf16>
    %2 = arith.extf %1 : vector<1x5x8xbf16> to vector<1x5x8xf32>
    %3 = vector.shape_cast %0 : vector<1x8x32xbf16> to vector<8x32xbf16>
    %c0_5 = arith.constant 0 : index
    %c0_6 = arith.constant 0 : index
    %4 = vector.load %arg3[%c0_5, %c0_6] : memref<32x128xbf16, #tpu.memory_space<vmem>>, vector<32x128xbf16>
    %cst = arith.constant dense<0.000000e+00> : vector<8x128xf32>
    %5 = tpu.matmul %3, %4, %cst {dimension_numbers = #tpu.dot_dimension_numbers<[1], [0], [0], [1], [0, 0, 1, 1], [], []>} : vector<8x32xbf16>, vector<32x128xbf16>, vector<8x128xf32> -> vector<8x128xf32>
    %c0_7 = arith.constant 0 : index
    %c0_8 = arith.constant 0 : index
    %6 = vector.load %arg4[%c0_7, %c0_8] : memref<1x128xf32, #tpu.memory_space<vmem>>, vector<1x128xf32>
    %7 = vector.broadcast %6 : vector<1x128xf32> to vector<8x128xf32>
    %8 = arith.addf %5, %7 : vector<8x128xf32>
    %9 = math.tanh %8 : vector<8x128xf32>
    %c0_9 = arith.constant 0 : index
    %c0_10 = arith.constant 0 : index
    %10 = vector.load %arg5[%c0_9, %c0_10] : memref<128x5xf32, #tpu.memory_space<vmem>>, vector<128x5xf32>
    %cst_11 = arith.constant dense<0.000000e+00> : vector<8x5xf32>
    %11 = tpu.matmul %9, %10, %cst_11 {dimension_numbers = #tpu.dot_dimension_numbers<[1], [0], [0], [1], [0, 0, 1, 1], [], []>} : vector<8x128xf32>, vector<128x5xf32>, vector<8x5xf32> -> vector<8x5xf32>
    %12 = vector.shape_cast %11 : vector<8x5xf32> to vector<1x8x5xf32>
    %13 = tpu.transpose %12, [0, 2, 1] : vector<1x8x5xf32> -> vector<1x5x8xf32>
    %cst_12 = arith.constant 5.000000e-01 : f32
    %14 = vector.broadcast %cst_12 : f32 to vector<1x5x8xf32>
    %15 = arith.cmpf ogt, %2, %14 : vector<1x5x8xf32>
    %cst_13 = arith.constant -1.000000e+08 : f32
    %16 = vector.broadcast %cst_13 : f32 to vector<1x5x8xf32>
    %17 = arith.select %15, %13, %16 : vector<1x5x8xi1>, vector<1x5x8xf32>
    %cst_14 = arith.constant dense<0xFF800000> : vector<1x5xf32>
    %18 = vector.multi_reduction <maximumf>, %17, %cst_14 [2] : vector<1x5x8xf32> to vector<1x5xf32>
    %19 = vector.shape_cast %18 : vector<1x5xf32> to vector<1x5x1xf32>
    %20 = vector.broadcast %19 : vector<1x5x1xf32> to vector<1x5x8xf32>
    %21 = arith.subf %17, %20 : vector<1x5x8xf32>
    %22 = math.exp %21 : vector<1x5x8xf32>
    %cst_15 = arith.constant dense<0.000000e+00> : vector<1x5xf32>
    %23 = vector.multi_reduction <add>, %22, %cst_15 [2] : vector<1x5x8xf32> to vector<1x5xf32>
    %24 = vector.shape_cast %23 : vector<1x5xf32> to vector<1x5x1xf32>
    %25 = tpu.reciprocal %24 {approx = true} : vector<1x5x1xf32> -> vector<1x5x1xf32>
    %26 = vector.broadcast %25 : vector<1x5x1xf32> to vector<1x5x8xf32>
    %27 = arith.mulf %22, %26 : vector<1x5x8xf32>
    %28 = arith.mulf %27, %2 : vector<1x5x8xf32>
    %29 = arith.truncf %28 : vector<1x5x8xf32> to vector<1x5x8xbf16>
    "tpu.trace_start"() <{level = 10 : i32, message = "brs,bsh->brh"}> : () -> ()
    %cst_16 = arith.constant dense<0.000000e+00> : vector<1x5x32xf32>
    %30 = tpu.matmul %29, %0, %cst_16 {dimension_numbers = #tpu.dot_dimension_numbers<[2], [1], [1], [2], [0, 0, 0, 1, 1, 2], [0], [0]>} : vector<1x5x8xbf16>, vector<1x8x32xbf16>, vector<1x5x32xf32> -> vector<1x5x32xf32>
    "tpu.trace_stop"() : () -> ()
    %c0_17 = arith.constant 0 : index
    %c0_18 = arith.constant 0 : index
    %c0_19 = arith.constant 0 : index
    %31 = vector.load %arg6[%c0_17, %c0_18, %c0_19] : memref<1x5x32xf32, #tpu.memory_space<vmem>>, vector<1x5x32xf32>
    tpu.vector_store %arg6[%c0_17, %c0_18, %c0_19], %30 {strides = array<i32>} : memref<1x5x32xf32, #tpu.memory_space<vmem>>, vector<1x5x32xf32>,
    return
  }
  func.func @transform_0(%arg0: i32) -> (i32, i32, i32) {
    %c0_i32 = arith.constant 0 : i32
    %c0_i32_0 = arith.constant 0 : i32
    %c0_i32_1 = arith.constant 0 : i32
    return %arg0, %c0_i32, %c0_i32_0 : i32, i32, i32
  }
  func.func @transform_1(%arg0: i32) -> (i32, i32, i32) {
    %c0_i32 = arith.constant 0 : i32
    %c0_i32_0 = arith.constant 0 : i32
    %c0_i32_1 = arith.constant 0 : i32
    return %arg0, %c0_i32, %c0_i32_0 : i32, i32, i32
  }
  func.func @transform_2(%arg0: i32) -> (i32, i32) {
    %c0_i32 = arith.constant 0 : i32
    %c0_i32_0 = arith.constant 0 : i32
    %c0_i32_1 = arith.constant 0 : i32
    return %c0_i32, %c0_i32_0 : i32, i32
  }
  func.func @transform_3(%arg0: i32) -> (i32, i32) {
    %c0_i32 = arith.constant 0 : i32
    %c0_i32_0 = arith.constant 0 : i32
    %c0_i32_1 = arith.constant 0 : i32
    return %c0_i32, %c0_i32_0 : i32, i32
  }
  func.func @transform_4(%arg0: i32) -> (i32, i32) {
    %c0_i32 = arith.constant 0 : i32
    %c0_i32_0 = arith.constant 0 : i32
    %c0_i32_1 = arith.constant 0 : i32
    return %c0_i32, %c0_i32_0 : i32, i32
  }
  func.func @transform_5(%arg0: i32) -> (i32, i32, i32) {
    %c0_i32 = arith.constant 0 : i32
    %c0_i32_0 = arith.constant 0 : i32
    %c0_i32_1 = arith.constant 0 : i32
    return %arg0, %c0_i32, %c0_i32_0 : i32, i32, i32
  }
}

</mosaic_0001>

<llo_original>
// kernel: tpu_custom_call.1
$region0: #{tpu_custom_call.1}
  #allocation0 [shape = 'u32[]', space=smem, size = 0x4, offset = 0x4, fixed_abs, tag = 'smem constant byte address 0x4 - core index']
  #allocation1 [shape = 'u32[144,128]{1,0:T(1,128)}', space=vmem, size = 0x12000, scoped, tag = 'internal scratch']
  %s0 = inlined_call_operand.vmem [shape: bf16[2,8,32], index: 0, kind: input, shape index: {}]
  %s1 = inlined_call_operand.vmem [shape: bf16[2,5,8], index: 1, kind: input, shape index: {}]
  %s2 = inlined_call_operand.vmem [shape: bf16[32,128], index: 2, kind: input, shape index: {}]
  %s3 = inlined_call_operand.vmem [shape: f32[1,128], index: 3, kind: input, shape index: {}]
  %s4 = inlined_call_operand.vmem [shape: f32[128,5], index: 4, kind: input, shape index: {}]
  %s5 = inlined_call_operand.vmem [shape: f32[2,5,32], index: 5, kind: output, shape index: {}]
  %s6 = sld [smem:[#allocation0]]
  $region53: #{tpu_custom_call.1} parent=0
    _
  %s8 = ssub.s32 1, %s6
  %s9 = scalar_select 0, %s8, %s6
  loop: start=0, step=1, limit=4
  $region2: #{tpu_custom_call.1} parent=0 // loop_pre_header
    _
  $region3: #{tpu_custom_call.1} parent=0 // loop_header
    %s11 = sphi 0, %s15
    %p12 = scmp.ge.s32.totalorder %s11, 4
    %s21 = sphi 0, %s23
    %s24 = sphi 0, %s21
    %s25 = sphi 0, %s24
    %s41 = sphi 0, %s25
    %s47 = sphi 0, %s49
    %s50 = sphi 0, %s47
    %s51 = sphi 0, %s50
    %s67 = sphi 0, %s51
    %s71 = sphi 0, %s71
    %s73 = sphi 0, %s71
    %s74 = sphi 0, %s73
    %s88 = sphi 0, %s74
    %s92 = sphi 0, %s92
    %s94 = sphi 0, %s92
    %s95 = sphi 0, %s94
    %s109 = sphi 0, %s95
    %s113 = sphi 0, %s113
    %s115 = sphi 0, %s113
    %s116 = sphi 0, %s115
    %s130 = sphi 0, %s116
    %s136 = sphi 0, %s138
    %s139 = sphi 0, %s136
    %s140 = sphi 0, %s139
    %s156 = sphi 0, %s140
  $region4: #{tpu_custom_call.1} parent=0 // loop_header_branch
    %14 = sbr.rel (%p12) target = $region8
  $region5: #{tpu_custom_call.1} parent=0 // loop_body
    %s16 = ssub.s32 %s11, 1
    %s17 = ssub.s32 %s11, 2
    %s18 = sadd.s32 %s11, 1
    %s19 = ssub.s32 %s11, %s18
    %p20 = scmp.eq.s32.totalorder %s19, 0
    %s22 = sadd.s32 %s21, 1
    %s23 = scalar_select %p20, %s21, %s22
    %p26 = pneg %p20
    %p27 = scmp.eq.s32.totalorder %s11, 1
    %p28 = por %p26, %p27
    %p29 = scmp.ne.s32.totalorder %s21, %s24
    %p30 = scmp.eq.s32.totalorder %s11, 0
    %p31 = por %p29, %p30
    %p32 = scmp.ne.s32.totalorder %s21, %s24
    %p33 = scmp.eq.s32.totalorder %s16, 1
    %p34 = por %p32, %p33
    %p35 = scmp.ne.s32.totalorder %s24, %s25
    %p36 = scmp.eq.s32.totalorder %s16, 0
    %p37 = por %p35, %p36
    %p38 = scmp.ne.s32.totalorder %s24, %s25
    %p39 = scmp.eq.s32.totalorder %s17, 1
    %p40 = por %p38, %p39
    %p42 = scmp.ne.s32.totalorder %s25, %s41
    %p43 = scmp.eq.s32.totalorder %s17, 0
    %p44 = por %p42, %p43
    %s45 = ssub.s32 %s11, %s18
    %p46 = scmp.eq.s32.totalorder %s45, 0
    %s48 = sadd.s32 %s47, 1
    %s49 = scalar_select %p46, %s47, %s48
    %p52 = pneg %p46
    %p53 = scmp.eq.s32.totalorder %s11, 1
    %p54 = por %p52, %p53
    %p55 = scmp.ne.s32.totalorder %s47, %s50
    %p56 = scmp.eq.s32.totalorder %s11, 0
    %p57 = por %p55, %p56
    %p58 = scmp.ne.s32.totalorder %s47, %s50
    %p59 = scmp.eq.s32.totalorder %s16, 1
    %p60 = por %p58, %p59
    %p61 = scmp.ne.s32.totalorder %s50, %s51
    %p62 = scmp.eq.s32.totalorder %s16, 0
    %p63 = por %p61, %p62
    %p64 = scmp.ne.s32.totalorder %s50, %s51
    %p65 = scmp.eq.s32.totalorder %s17, 1
    %p66 = por %p64, %p65
    %p68 = scmp.ne.s32.totalorder %s51, %s67
    %p69 = scmp.eq.s32.totalorder %s17, 0
    %p70 = por %p68, %p69
    %s72 = sadd.s32 %s71, 1
    %p75 = scmp.eq.s32.totalorder %s11, 1
    %p76 = scmp.ne.s32.totalorder %s71, %s73
    %p77 = scmp.eq.s32.totalorder %s11, 0
    %p78 = por %p76, %p77
    %p79 = scmp.ne.s32.totalorder %s71, %s73
    %p80 = scmp.eq.s32.totalorder %s16, 1
    %p81 = por %p79, %p80
    %p82 = scmp.ne.s32.totalorder %s73, %s74
    %p83 = scmp.eq.s32.totalorder %s16, 0
    %p84 = por %p82, %p83
    %p85 = scmp.ne.s32.totalorder %s73, %s74
    %p86 = scmp.eq.s32.totalorder %s17, 1
    %p87 = por %p85, %p86
    %p89 = scmp.ne.s32.totalorder %s74, %s88
    %p90 = scmp.eq.s32.totalorder %s17, 0
    %p91 = por %p89, %p90
    %s93 = sadd.s32 %s92, 1
    %p96 = scmp.eq.s32.totalorder %s11, 1
    %p97 = scmp.ne.s32.totalorder %s92, %s94
    %p98 = scmp.eq.s32.totalorder %s11, 0
    %p99 = por %p97, %p98
    %p100 = scmp.ne.s32.totalorder %s92, %s94
    %p101 = scmp.eq.s32.totalorder %s16, 1
    %p102 = por %p100, %p101
    %p103 = scmp.ne.s32.totalorder %s94, %s95
    %p104 = scmp.eq.s32.totalorder %s16, 0
    %p105 = por %p103, %p104
    %p106 = scmp.ne.s32.totalorder %s94, %s95
    %p107 = scmp.eq.s32.totalorder %s17, 1
    %p108 = por %p106, %p107
    %p110 = scmp.ne.s32.totalorder %s95, %s109
    %p111 = scmp.eq.s32.totalorder %s17, 0
    %p112 = por %p110, %p111
    %s114 = sadd.s32 %s113, 1
    %p117 = scmp.eq.s32.totalorder %s11, 1
    %p118 = scmp.ne.s32.totalorder %s113, %s115
    %p119 = scmp.eq.s32.totalorder %s11, 0
    %p120 = por %p118, %p119
    %p121 = scmp.ne.s32.totalorder %s113, %s115
    %p122 = scmp.eq.s32.totalorder %s16, 1
    %p123 = por %p121, %p122
    %p124 = scmp.ne.s32.totalorder %s115, %s116
    %p125 = scmp.eq.s32.totalorder %s16, 0
    %p126 = por %p124, %p125
    %p127 = scmp.ne.s32.totalorder %s115, %s116
    %p128 = scmp.eq.s32.totalorder %s17, 1
    %p129 = por %p127, %p128
    %p131 = scmp.ne.s32.totalorder %s116, %s130
    %p132 = scmp.eq.s32.totalorder %s17, 0
    %p133 = por %p131, %p132
    %s134 = ssub.s32 %s11, %s18
    %p135 = scmp.eq.s32.totalorder %s134, 0
    %s137 = sadd.s32 %s136, 1
    %s138 = scalar_select %p135, %s136, %s137
    %p141 = pneg %p135
    %p142 = scmp.eq.s32.totalorder %s11, 1
    %p143 = por %p141, %p142
    %p144 = scmp.ne.s32.totalorder %s136, %s139
    %p145 = scmp.eq.s32.totalorder %s11, 0
    %p146 = por %p144, %p145
    %p147 = scmp.ne.s32.totalorder %s136, %s139
    %p148 = scmp.eq.s32.totalorder %s16, 1
    %p149 = por %p147, %p148
    %p150 = scmp.ne.s32.totalorder %s139, %s140
    %p151 = scmp.eq.s32.totalorder %s16, 0
    %p152 = por %p150, %p151
    %p153 = scmp.ne.s32.totalorder %s139, %s140
    %p154 = scmp.eq.s32.totalorder %s17, 1
    %p155 = por %p153, %p154
    %p157 = scmp.ne.s32.totalorder %s140, %s156
    %p158 = scmp.eq.s32.totalorder %s17, 0
    %p159 = por %p157, %p158
    %p160 = scmp.le.s32.totalorder 1, %s11
    %p161 = scmp.lt.s32.totalorder %s11, 3
    %p162 = pnand %p160, %p161
    %p163 = pneg %p162
    // Predicated region
    $region9: #{tpu_custom_call.1} parent=5 // pred_check
      _
    $region10: #{tpu_custom_call.1} parent=5 // pred_check_branch
      %165 = sbr.rel (%p162) target = $region12
    $region11: #{tpu_custom_call.1} parent=5 // pred_region
      %s166 = ssub.s32 %s11, 1
      // Predicated region
      $region13: #{tpu_custom_call.1} parent=11 // pred_check
        %p167 = pneg %p84
      $region14: #{tpu_custom_call.1} parent=11 // pred_check_branch
        %169 = sbr.rel (%p167) target = $region16
      $region15: #{tpu_custom_call.1} parent=11 // pred_region
        _
      $region16: #{tpu_custom_call.1} parent=11 // pred_fallthru
        _
      // Predicated region
      $region17: #{tpu_custom_call.1} parent=11 // pred_check
        %p170 = pneg %p105
      $region18: #{tpu_custom_call.1} parent=11 // pred_check_branch
        %172 = sbr.rel (%p170) target = $region20
      $region19: #{tpu_custom_call.1} parent=11 // pred_region
        _
      $region20: #{tpu_custom_call.1} parent=11 // pred_fallthru
        _
      // Predicated region
      $region21: #{tpu_custom_call.1} parent=11 // pred_check
        %p173 = pneg %p126
      $region22: #{tpu_custom_call.1} parent=11 // pred_check_branch
        %175 = sbr.rel (%p173) target = $region24
      $region23: #{tpu_custom_call.1} parent=11 // pred_region
        _
      $region24: #{tpu_custom_call.1} parent=11 // pred_fallthru
        _
    $region12: #{tpu_custom_call.1} parent=5 // pred_fallthru
      _
    %p176 = scmp.lt.s32.totalorder %s11, 2
    // Predicated region
    $region25: #{tpu_custom_call.1} parent=5 // pred_check
      %p177 = pneg %p176
    $region26: #{tpu_custom_call.1} parent=5 // pred_check_branch
      %179 = sbr.rel (%p177) target = $region28
    $region27: #{tpu_custom_call.1} parent=5 // pred_region
      // Predicated region
      $region29: #{tpu_custom_call.1} parent=27 // pred_check
        %p180 = pneg %p31
      $region30: #{tpu_custom_call.1} parent=27 // pred_check_branch
        %182 = sbr.rel (%p180) target = $region32
      $region31: #{tpu_custom_call.1} parent=27 // pred_region
        %p183 = scmp.lt.s32.totalorder %s11, 1
        %s184 = scalar_select %p183, %s11, 1
        %s185 = smul.addr %s184, 4
        %s186 = scalar_lea.vmem %s0, %s185
      $region32: #{tpu_custom_call.1} parent=27 // pred_fallthru
        _
      // Predicated region
      $region33: #{tpu_custom_call.1} parent=27 // pred_check
        %p187 = pneg %p57
      $region34: #{tpu_custom_call.1} parent=27 // pred_check_branch
        %189 = sbr.rel (%p187) target = $region36
      $region35: #{tpu_custom_call.1} parent=27 // pred_region
        %p190 = scmp.lt.s32.totalorder %s11, 1
        %s191 = scalar_select %p190, %s11, 1
        %s192 = smul.addr %s191, 4
        %s193 = scalar_lea.vmem %s1, %s192
      $region36: #{tpu_custom_call.1} parent=27 // pred_fallthru
        _
    $region28: #{tpu_custom_call.1} parent=5 // pred_fallthru
      _
    %p194 = scmp.le.s32.totalorder 1, %s11
    %p195 = scmp.lt.s32.totalorder %s11, 3
    %p196 = pnand %p194, %p195
    %p197 = pneg %p196
    // Predicated region
    $region37: #{tpu_custom_call.1} parent=5 // pred_check
      _
    $region38: #{tpu_custom_call.1} parent=5 // pred_check_branch
      %199 = sbr.rel (%p196) target = $region40
    $region39: #{tpu_custom_call.1} parent=5 // pred_region
      %s200 = ssub.s32 %s11, 1
      %p201 = scmp.lt.s32.totalorder %s16, 1
      %s202 = scalar_select %p201, %s16, 1
      %s203 = smul.addr %s202, 4
      %s204 = scalar_lea.vmem %s0, %s203
      %p205 = pneg %p37
      %p206 = pneg %p34
      %p207 = scmp.lt.s32.totalorder %s16, 1
      %s208 = scalar_select %p207, %s16, 1
      %s209 = smul.addr %s208, 4
      %s210 = scalar_lea.vmem %s1, %s209
      %p211 = pneg %p63
      %p212 = pneg %p60
      %p213 = pneg %p84
      %p214 = pneg %p81
      %p215 = pneg %p105
      %p216 = pneg %p102
      %p217 = pneg %p126
      %p218 = pneg %p123
      %p219 = pneg %p152
      %p220 = pneg %p149
      %p221 = scmp.lt.s32.totalorder %s16, 1
      %s222 = scalar_select %p221, %s16, 1
      %s223 = smul.addr %s222, 8
      %s224 = scalar_lea.vmem %s5, %s223
      %p225 = scmp.lt.s32.totalorder %s16, 1
      %s226 = scalar_select %p225, %s16, 1
      %s227 = smul.addr %s226, 4
      %s228 = scalar_lea.vmem %s0, %s227
      %p229 = scmp.lt.s32.totalorder %s16, 1
      %s230 = scalar_select %p229, %s16, 1
      %s231 = smul.addr %s230, 4
      %s232 = scalar_lea.vmem %s1, %s231
      %p233 = scmp.lt.s32.totalorder %s16, 1
      %s234 = scalar_select %p233, %s16, 1
      %s235 = smul.addr %s234, 8
      %s236 = scalar_lea.vmem %s5, %s235
      %v238 = vld [vmem:[%s228] sm:$0xf]
      %v239 = vld [vmem:[%s232] sm:$0x7]
      %v240 = vunpack.c.l.bf16 %v239
      %v241 = vld [vmem:[%s2] sm:$0xf]
      %v242 = vld [vmem:[%s2 + $0x4] sm:$0xf]
      %v243 = vld [vmem:[%s2 + $0x8] sm:$0xf]
      %v244 = vld [vmem:[%s2 + $0xc] sm:$0xf]
      %v245 = vld [vmem:[%s3] sm:$0x1]
      %v247 = vlaneseq
      %v248 = vshrl.u32 %v247, 7
      %v249 = vsub.s32 0, %v248
      %v250 = vrot.slane %v245, %v249
      %v256 = vunpack.c.l.b16 %v241
      %v257 = vunpack.c.l.b16 %v242
      %v258 = vunpack.c.l.b16 %v243
      %v259 = vunpack.c.l.b16 %v244
      %v260 = vpack.c.b16 %v257, %v256
      %v261 = vpack.c.b16 %v259, %v258
      %vm264 = vcmask 261120
      %v266 = vsel %vm264, %v238, 0
      %268 = vmatprep.subr.bf16.mxu0 0
      %269 = vmatpush1.bf16.msra.mxu0 %v260
      %270 = vmatprep.subr.bf16.mxu0 0
      %271 = vmatpush1.bf16.msra.mxu0 %v261
      %272 = vmatprep.subr.bf16.mxu0 0
      %273 = vmatpush1.bf16.msra.mxu0 0
      %274 = vmatprep.subr.bf16.mxu0 0
      %275 = vmatpush1.bf16.msra.mxu0 0
      %276 = vmatprep.subr.bf16.mxu0 0
      %277 = vmatpush1.bf16.msra.mxu0 0
      %278 = vmatprep.subr.bf16.mxu0 0
      %279 = vmatpush1.bf16.msra.mxu0 0
      %280 = vmatprep.subr.bf16.mxu0 0
      %281 = vmatpush1.bf16.msra.mxu0 0
      %282 = vmatprep.subr.bf16.mxu0 0
      %283 = vmatpush1.bf16.msra.mxu0 0
      %284 = vmatprep.subr.bf16.mxu0 0
      %285 = vmatpush1.bf16.msra.mxu0 0
      %286 = vmatprep.subr.bf16.mxu0 0
      %287 = vmatpush1.bf16.msra.mxu0 0
      %288 = vmatprep.subr.bf16.mxu0 0
      %289 = vmatpush1.bf16.msra.mxu0 0
      %290 = vmatprep.subr.bf16.mxu0 0
      %291 = vmatpush1.bf16.msra.mxu0 0
      %292 = vmatprep.subr.bf16.mxu0 0
      %293 = vmatpush1.bf16.msra.mxu0 0
      %294 = vmatprep.subr.bf16.mxu0 0
      %295 = vmatpush1.bf16.msra.mxu0 0
      %296 = vmatprep.subr.bf16.mxu0 0
      %297 = vmatpush1.bf16.msra.mxu0 0
      %298 = vmatprep.subr.bf16.mxu0 0
      %299 = vmatpush1.bf16.msra.mxu0 0
      %300 = vmatprep.mubr.bf16.mxu0 0
      %301 = vmatmul.mubr.bf16.gmra.mrb[0].mxu0 %v266
      %v302 = vpop.f32.mrb[0].mxu0
      %v303 = vadd.f32 %v250, %v302
      %v304 = vpop.f32.mrb[0].mxu0
      %v305 = vpop.f32.mrb[0].mxu0
      %v306 = vpop.f32.mrb[0].mxu0
      %307 = vdwg.mxu0
      %v308 = vtanh.pop %v303
      %v309 = vld [vmem:[%s4] sm:$0xff]
      %v310 = vld [vmem:[%s4 + $0x8] sm:$0xff]
      %v311 = vld [vmem:[%s4 + $0x10] sm:$0xff]
      %v312 = vld [vmem:[%s4 + $0x18] sm:$0xff]
      %v313 = vld [vmem:[%s4 + $0x20] sm:$0xff]
      %v314 = vld [vmem:[%s4 + $0x28] sm:$0xff]
      %v315 = vld [vmem:[%s4 + $0x30] sm:$0xff]
      %v316 = vld [vmem:[%s4 + $0x38] sm:$0xff]
      %v317 = vld [vmem:[%s4 + $0x40] sm:$0xff]
      %v318 = vld [vmem:[%s4 + $0x48] sm:$0xff]
      %v319 = vld [vmem:[%s4 + $0x50] sm:$0xff]
      %v320 = vld [vmem:[%s4 + $0x58] sm:$0xff]
      %v321 = vld [vmem:[%s4 + $0x60] sm:$0xff]
      %v322 = vld [vmem:[%s4 + $0x68] sm:$0xff]
      %v323 = vld [vmem:[%s4 + $0x70] sm:$0xff]
      %v324 = vld [vmem:[%s4 + $0x78] sm:$0xff]
      %325 = vmatprep.subr.mxu0 0.0
      %326 = vmatpush1.msra.mxu0 %v309
      %327 = vmatprep.subr.mxu0 0.0
      %328 = vmatpush1.msra.mxu0 %v310
      %329 = vmatprep.subr.mxu0 0.0
      %330 = vmatpush1.msra.mxu0 %v311
      %331 = vmatprep.subr.mxu0 0.0
      %332 = vmatpush1.msra.mxu0 %v312
      %333 = vmatprep.subr.mxu0 0.0
      %334 = vmatpush1.msra.mxu0 %v313
      %335 = vmatprep.subr.mxu0 0.0
      %336 = vmatpush1.msra.mxu0 %v314
      %337 = vmatprep.subr.mxu0 0.0
      %338 = vmatpush1.msra.mxu0 %v315
      %339 = vmatprep.subr.mxu0 0.0
      %340 = vmatpush1.msra.mxu0 %v316
      %341 = vmatprep.subr.mxu0 0.0
      %342 = vmatpush1.msra.mxu0 %v317
      %343 = vmatprep.subr.mxu0 0.0
      %344 = vmatpush1.msra.mxu0 %v318
      %345 = vmatprep.subr.mxu0 0.0
      %346 = vmatpush1.msra.mxu0 %v319
      %347 = vmatprep.subr.mxu0 0.0
      %348 = vmatpush1.msra.mxu0 %v320
      %349 = vmatprep.subr.mxu0 0.0
      %350 = vmatpush1.msra.mxu0 %v321
      %351 = vmatprep.subr.mxu0 0.0
      %352 = vmatpush1.msra.mxu0 %v322
      %353 = vmatprep.subr.mxu0 0.0
      %354 = vmatpush1.msra.mxu0 %v323
      %355 = vmatprep.subr.mxu0 0.0
      %356 = vmatpush1.msra.mxu0 %v324
      %357 = vmatprep.subr.mxu0 0.0
      %358 = vmatpush1.msra.mxu0 0.0
      %359 = vmatprep.subr.mxu0 0.0
      %360 = vmatpush1.msra.mxu0 0.0
      %361 = vmatprep.subr.mxu0 0.0
      %362 = vmatpush1.msra.mxu0 0.0
      %363 = vmatprep.subr.mxu0 0.0
      %364 = vmatpush1.msra.mxu0 0.0
      %365 = vmatprep.subr.mxu0 0.0
      %366 = vmatpush1.msra.mxu0 0.0
      %367 = vmatprep.subr.mxu0 0.0
      %368 = vmatpush1.msra.mxu0 0.0
      %369 = vmatprep.subr.mxu0 0.0
      %370 = vmatpush1.msra.mxu0 0.0
      %371 = vmatprep.subr.mxu0 0.0
      %372 = vmatpush1.msra.mxu0 0.0
      %373 = vmatprep.subr.mxu0 0.0
      %374 = vmatpush1.msra.mxu0 0.0
      %375 = vmatprep.subr.mxu0 0.0
      %376 = vmatpush1.msra.mxu0 0.0
      %377 = vmatprep.subr.mxu0 0.0
      %378 = vmatpush1.msra.mxu0 0.0
      %379 = vmatprep.subr.mxu0 0.0
      %380 = vmatpush1.msra.mxu0 0.0
      %381 = vmatprep.subr.mxu0 0.0
      %382 = vmatpush1.msra.mxu0 0.0
      %383 = vmatprep.subr.mxu0 0.0
      %384 = vmatpush1.msra.mxu0 0.0
      %385 = vmatprep.subr.mxu0 0.0
      %386 = vmatpush1.msra.mxu0 0.0
      %387 = vmatprep.subr.mxu0 0.0
      %388 = vmatpush1.msra.mxu0 0.0
      %389 = vmatprep.mubr.f32.mxu0 0.0
      %390 = vmatmul.mubr.f32.gmra.mrb[0].mxu0 %v308
      %v391 = vpop.f32.mrb[0].mxu0
      %v392 = vadd.f32 0.0, %v391
      %v393 = vpop.f32.mrb[0].mxu0
      %394 = vdwg.mxu0
      %395 = vxpose.xlu0.b32.start [1/16] %v392, 128
      %396 = vxpose.xlu0.b32.cont [2/16] 0.0, 128
      %397 = vxpose.xlu0.b32.cont [3/16] 0.0, 128
      %398 = vxpose.xlu0.b32.cont [4/16] 0.0, 128
      %399 = vxpose.xlu0.b32.cont [5/16] 0.0, 128
      %400 = vxpose.xlu0.b32.cont [6/16] 0.0, 128
      %401 = vxpose.xlu0.b32.cont [7/16] 0.0, 128
      %402 = vxpose.xlu0.b32.cont [8/16] 0.0, 128
      %403 = vxpose.xlu0.b32.cont [9/16] 0.0, 128
      %404 = vxpose.xlu0.b32.cont [10/16] 0.0, 128
      %405 = vxpose.xlu0.b32.cont [11/16] 0.0, 128
      %406 = vxpose.xlu0.b32.cont [12/16] 0.0, 128
      %407 = vxpose.xlu0.b32.cont [13/16] 0.0, 128
      %408 = vxpose.xlu0.b32.cont [14/16] 0.0, 128
      %409 = vxpose.xlu0.b32.cont [15/16] 0.0, 128
      %410 = vxpose.xlu0.b32.end [16/16] 0.0, 128
      %v411 = vpop.trf.xlu0
      %v412 = vpop.trf.xlu0
      %v413 = vpop.trf.xlu0
      %v414 = vpop.trf.xlu0
      %v415 = vpop.trf.xlu0
      %v416 = vpop.trf.xlu0
      %v417 = vpop.trf.xlu0
      %v418 = vpop.trf.xlu0
      %v419 = vpop.trf.xlu0
      %v420 = vpop.trf.xlu0
      %v421 = vpop.trf.xlu0
      %v422 = vpop.trf.xlu0
      %v423 = vpop.trf.xlu0
      %v424 = vpop.trf.xlu0
      %v425 = vpop.trf.xlu0
      %v426 = vpop.trf.xlu0
      %vm427 = vcmp.gt.f32.partialorder %v240, 0.5
      %v428 = vsel %vm427, %v411, -1e+08
      %vm429 = vcmask 61440
      %v430 = vsel %vm429, %v428, -inf
      %431 = vmax.xlane.f32.xlu0 %v430
      %v432 = vpop.xlane.xlu0 %431
      %v433 = vsub.f32 %v428, %v432
      %v434 = vmul.f32 %v433, 1.442695
      %v435 = vpow.pop %v434
      %v436 = vsel %vm429, %v435, 0.0
      %437 = vadd.xlane.f32.xlu0 %v436
      %v438 = vpop.xlane.xlu0 %437
      %v439 = vrcp.pop %v438
      %v440 = vmul.f32 %v435, %v439
      %v441 = vmul.f32 %v440, %v240
      %v442 = vpack.c.bf16 %v441, %v441
      %vm443 = vcmask 64512
      %v445 = vsel %vm443, %v442, 0
      %vm447 = vcmask 1043456
      %v448 = vsel %vm447, %v238, 0
      %450 = vmatprep.subr.bf16.mxu0 0
      %451 = vmatpush1.bf16.msra.mxu0 %v448
      %452 = vmatprep.subr.bf16.mxu0 0
      %453 = vmatpush1.bf16.msra.mxu0 0
      %454 = vmatprep.subr.bf16.mxu0 0
      %455 = vmatpush1.bf16.msra.mxu0 0
      %456 = vmatprep.subr.bf16.mxu0 0
      %457 = vmatpush1.bf16.msra.mxu0 0
      %458 = vmatprep.subr.bf16.mxu0 0
      %459 = vmatpush1.bf16.msra.mxu0 0
      %460 = vmatprep.subr.bf16.mxu0 0
      %461 = vmatpush1.bf16.msra.mxu0 0
      %462 = vmatprep.subr.bf16.mxu0 0
      %463 = vmatpush1.bf16.msra.mxu0 0
      %464 = vmatprep.subr.bf16.mxu0 0
      %465 = vmatpush1.bf16.msra.mxu0 0
      %466 = vmatprep.subr.bf16.mxu0 0
      %467 = vmatpush1.bf16.msra.mxu0 0
      %468 = vmatprep.subr.bf16.mxu0 0
      %469 = vmatpush1.bf16.msra.mxu0 0
      %470 = vmatprep.subr.bf16.mxu0 0
      %471 = vmatpush1.bf16.msra.mxu0 0
      %472 = vmatprep.subr.bf16.mxu0 0
      %473 = vmatpush1.bf16.msra.mxu0 0
      %474 = vmatprep.subr.bf16.mxu0 0
      %475 = vmatpush1.bf16.msra.mxu0 0
      %476 = vmatprep.subr.bf16.mxu0 0
      %477 = vmatpush1.bf16.msra.mxu0 0
      %478 = vmatprep.subr.bf16.mxu0 0
      %479 = vmatpush1.bf16.msra.mxu0 0
      %480 = vmatprep.subr.bf16.mxu0 0
      %481 = vmatpush1.bf16.msra.mxu0 0
      %482 = vmatprep.mubr.bf16.mxu0 0
      %483 = vmatmul.mubr.bf16.gmra.mrb[0].mxu0 %v445
      %v484 = vpop.f32.mrb[0].mxu0
      %v485 = vadd.f32 0.0, %v484
      %v486 = vpop.f32.mrb[0].mxu0
      %v487 = vpop.f32.mrb[0].mxu0
      %v488 = vpop.f32.mrb[0].mxu0
      %489 = vdwg.mxu0
      %vm490 = vcmask 258048
      %491 = vst.msk [vmem:[%s236] sm:$0x1f] %vm490, %v485
      %p492 = scmp.lt.s32.totalorder %s16, 1
      %s493 = scalar_select %p492, %s16, 1
      %s494 = smul.addr %s493, 8
      %s495 = scalar_lea.vmem %s5, %s494
      // Predicated region
      $region41: #{tpu_custom_call.1} parent=39 // pred_check
        %p496 = pneg %p149
      $region42: #{tpu_custom_call.1} parent=39 // pred_check_branch
        %498 = sbr.rel (%p496) target = $region44
      $region43: #{tpu_custom_call.1} parent=39 // pred_region
        _
      $region44: #{tpu_custom_call.1} parent=39 // pred_fallthru
        _
    $region40: #{tpu_custom_call.1} parent=5 // pred_fallthru
      _
    %p499 = scmp.le.s32.totalorder 2, %s11
    // Predicated region
    $region45: #{tpu_custom_call.1} parent=5 // pred_check
      %p500 = pneg %p499
    $region46: #{tpu_custom_call.1} parent=5 // pred_check_branch
      %502 = sbr.rel (%p500) target = $region48
    $region47: #{tpu_custom_call.1} parent=5 // pred_region
      %s503 = ssub.s32 %s11, 2
      // Predicated region
      $region49: #{tpu_custom_call.1} parent=47 // pred_check
        %p504 = pneg %p155
      $region50: #{tpu_custom_call.1} parent=47 // pred_check_branch
        %506 = sbr.rel (%p504) target = $region52
      $region51: #{tpu_custom_call.1} parent=47 // pred_region
        %p507 = scmp.lt.s32.totalorder %s17, 1
        %s508 = scalar_select %p507, %s17, 1
        %s509 = smul.addr %s508, 8
        %s510 = scalar_lea.vmem %s5, %s509
      $region52: #{tpu_custom_call.1} parent=47 // pred_fallthru
        _
    $region48: #{tpu_custom_call.1} parent=5 // pred_fallthru
      _
  $region6: #{tpu_custom_call.1} parent=0 // loop_footer
    %s15 = sadd.s32 1, %s11
  $region7: #{tpu_custom_call.1} parent=0 // loop_footer_branch
    %10 = sbr.rel target = $region3
  $region8: #{tpu_custom_call.1} parent=0 // loop_exit
    _

</llo_original>
